<compile_context>
chip_gen: v6e
topology: v6e:2x2x1
jax: 0.10.0
libtpu: 0.0.40
codegen_flags: <defaults>
</compile_context>

<pallas_src>
import jax
import jax.numpy as jnp
from jax.experimental import pallas as pl
from jax.experimental.pallas import tpu as pltpu


def logistic_kernel(x_ref, w_ref, b_ref, o_ref):
    # z[b] = sum_f x[b, f] * w[0, f] + bias   (VPU mul + XLU lane-reduce, no MXU)
    z = jnp.sum(x_ref[...] * w_ref[...], axis=-1, keepdims=True) + b_ref[0, 0]
    # sigmoid: exp lowers to the EUP slot; exact reciprocal keeps f32 accuracy.
    o_ref[...] = (1.0 / (1.0 + jnp.exp(-z))).astype(o_ref.dtype)


def _pick_batch_tile(batch, n_features, vmem_limit_bytes):
    """Largest batch tile such that two double-buffered (TB, F) f32 x-tiles fit
    a conservative slice of the scoped VMEM budget; multiple of 8, <= 1024."""
    bytes_per_row = n_features * 4
    rows_fit = max(8, (vmem_limit_bytes // 3) // (2 * bytes_per_row))
    tb = int(min(1024, rows_fit, batch))
    if tb < batch:
        tb = max(8, (tb // 8) * 8)
    return tb


def logistic_forward(x, w, b, *, block_b=None,
                     vmem_limit_bytes=48 * 1024 * 1024):
    """x: (B, F) f32, w: (1, F) f32 (nn.Linear weight), b: (1, 1) f32 -> (B, 1)."""
    B, F = x.shape
    if block_b is None:
        block_b = _pick_batch_tile(B, F, vmem_limit_bytes)
    grid = (pl.cdiv(B, block_b),)
    return pl.pallas_call(
        logistic_kernel,
        out_shape=jax.ShapeDtypeStruct((B, 1), x.dtype),
        grid_spec=pltpu.PrefetchScalarGridSpec(
            num_scalar_prefetch=0,
            grid=grid,
            in_specs=[
                # x: stream (TB, F) row tiles; double-buffered by Pallas.
                pl.BlockSpec((block_b, F), lambda i: (i, 0)),
                # w: full (1, F) row; same block every step -> stays resident.
                pl.BlockSpec((1, F), lambda i: (0, 0)),
                # bias scalar in SMEM with an explicit (1, 1) block.
                pl.BlockSpec((1, 1), lambda i: (0, 0), memory_space=pltpu.SMEM),
            ],
            out_specs=pl.BlockSpec((block_b, 1), lambda i: (i, 0)),
        ),
        compiler_params=pltpu.CompilerParams(
            dimension_semantics=("parallel",),   # shard batch across TCs on v7x
            vmem_limit_bytes=vmem_limit_bytes,   # > 16/32 MiB defaults, < 64 MiB v7x
        ),
    )(x, w, b)


if __name__ == "__main__":
    batch = 8
    n_features = 32

    key = jax.random.PRNGKey(0)
    kx, kw, kb, kx2 = jax.random.split(key, 4)

    # Deterministic "PyTorch-like" init: uniform(-1/sqrt(fan_in), +1/sqrt(fan_in))
    bound = 1.0 / jnp.sqrt(jnp.float32(n_features))
    weight = jax.random.uniform(kw, (1, n_features), jnp.float32, -bound, bound)
    bias = jax.random.uniform(kb, (1,), jnp.float32, -bound, bound)
    b2d = bias.reshape(1, 1)

    # Small case (tutorial scale): single tile, pure launch overhead.
    x = jax.random.normal(kx, (batch, n_features), jnp.float32)
    y = logistic_forward(x, weight, b2d)
    jax.block_until_ready(y)
    y_ref = jax.nn.sigmoid(x @ weight.T + bias)
    assert y.shape == (batch, 1)
    assert jnp.allclose(y, y_ref, atol=1e-5, rtol=1e-5)

    # Larger case exercising the batch-tiled pipeline, incl. a partial last tile.
    big_batch = 300
    x2 = jax.random.normal(kx2, (big_batch, n_features), jnp.float32)
    y2 = logistic_forward(x2, weight, b2d, block_b=128)
    jax.block_until_ready(y2)
    y2_ref = jax.nn.sigmoid(x2 @ weight.T + bias)
    assert y2.shape == (big_batch, 1)
    assert jnp.allclose(y2, y2_ref, atol=1e-5, rtol=1e-5)

    print("KERNEL_OK")
</pallas_src>

<mosaic_0001>
module attributes {stable_mosaic.version = 11 : i64} {
  func.func @logistic_kernel(%arg0: i32, %arg1: memref<8x32xf32, #tpu.memory_space<vmem>>, %arg2: memref<1x32xf32, #tpu.memory_space<vmem>>, %arg3: memref<1x1xf32, #tpu.memory_space<smem>>, %arg4: memref<8x1xf32, #tpu.memory_space<vmem>>) attributes {dimension_semantics = [#tpu.dimension_semantics<parallel>], iteration_bounds = array<i64: 1>, scalar_prefetch = 0 : i64, scratch_operands = 0 : i64, tpu.core_type = #tpu.core_type<tc>, window_params = [{transform_indices = @transform_0, window_bounds = array<i64: 8, 32>}, {pipeline_mode = #tpu.pipeline_mode<synchronous>, transform_indices = @transform_1, window_bounds = array<i64: 1, 32>}, {transform_indices = @transform_2, window_bounds = array<i64: 1, 1>}, {transform_indices = @transform_3, window_bounds = array<i64: 8, 1>}]} {
    %c0 = arith.constant 0 : index
    %c0_0 = arith.constant 0 : index
    %0 = vector.load %arg1[%c0, %c0_0] : memref<8x32xf32, #tpu.memory_space<vmem>>, vector<8x32xf32>
    %c0_1 = arith.constant 0 : index
    %c0_2 = arith.constant 0 : index
    %1 = vector.load %arg2[%c0_1, %c0_2] : memref<1x32xf32, #tpu.memory_space<vmem>>, vector<1x32xf32>
    %2 = vector.broadcast %1 : vector<1x32xf32> to vector<8x32xf32>
    %3 = arith.mulf %0, %2 : vector<8x32xf32>
    %cst = arith.constant dense<0.000000e+00> : vector<8xf32>
    %4 = vector.multi_reduction <add>, %3, %cst [1] : vector<8x32xf32> to vector<8xf32>
    %5 = vector.shape_cast %4 : vector<8xf32> to vector<8x1xf32>
    %c0_3 = arith.constant 0 : index
    %c0_4 = arith.constant 0 : index
    %6 = memref.load %arg3[%c0_3, %c0_4] : memref<1x1xf32, #tpu.memory_space<smem>>
    %7 = vector.broadcast %6 : f32 to vector<8x1xf32>
    %8 = arith.addf %5, %7 : vector<8x1xf32>
    %cst_5 = arith.constant 0.000000e+00 : f32
    %9 = vector.broadcast %cst_5 : f32 to vector<8x1xf32>
    %10 = arith.subf %9, %8 : vector<8x1xf32>
    %11 = math.exp %10 : vector<8x1xf32>
    %cst_6 = arith.constant 1.000000e+00 : f32
    %12 = vector.broadcast %cst_6 : f32 to vector<8x1xf32>
    %13 = arith.addf %12, %11 : vector<8x1xf32>
    %cst_7 = arith.constant 1.000000e+00 : f32
    %14 = vector.broadcast %cst_7 : f32 to vector<8x1xf32>
    %15 = arith.divf %14, %13 : vector<8x1xf32>
    %c0_8 = arith.constant 0 : index
    %c0_9 = arith.constant 0 : index
    %16 = vector.load %arg4[%c0_8, %c0_9] : memref<8x1xf32, #tpu.memory_space<vmem>>, vector<8x1xf32>
    tpu.vector_store %arg4[%c0_8, %c0_9], %15 {strides = array<i32>} : memref<8x1xf32, #tpu.memory_space<vmem>>, vector<8x1xf32>,
    return
  }
  func.func @transform_0(%arg0: i32) -> (i32, i32) {
    %c0_i32 = arith.constant 0 : i32
    %c0_i32_0 = arith.constant 0 : i32
    return %arg0, %c0_i32 : i32, i32
  }
  func.func @transform_1(%arg0: i32) -> (i32, i32) {
    %c0_i32 = arith.constant 0 : i32
    %c0_i32_0 = arith.constant 0 : i32
    %c0_i32_1 = arith.constant 0 : i32
    return %c0_i32, %c0_i32_0 : i32, i32
  }
  func.func @transform_2(%arg0: i32) -> (i32, i32) {
    %c0_i32 = arith.constant 0 : i32
    %c0_i32_0 = arith.constant 0 : i32
    %c0_i32_1 = arith.constant 0 : i32
    return %c0_i32, %c0_i32_0 : i32, i32
  }
  func.func @transform_3(%arg0: i32) -> (i32, i32) {
    %c0_i32 = arith.constant 0 : i32
    %c0_i32_0 = arith.constant 0 : i32
    return %arg0, %c0_i32 : i32, i32
  }
}

</mosaic_0001>

<llo_original>
// kernel: tpu_custom_call.1
$region0: #{tpu_custom_call.1}
  #allocation0 [shape = 'u32[]', space=smem, size = 0x4, offset = 0x4, fixed_abs, tag = 'smem constant byte address 0x4 - core index']
  #allocation1 [shape = 'u32[144,128]{1,0:T(1,128)}', space=vmem, size = 0x12000, scoped, tag = 'internal scratch']
  #allocation2 [shape = 'f32[1,1]{1,0:T(1,128)S(6)}', space=smem, size = 0x200, scoped, tag = 'scoped memory for tpu_custom_call.1']
  %s0 = inlined_call_operand.hbm [shape: f32[8,32], index: 0, kind: input, shape index: {}]
  %s1 = inlined_call_operand.vmem [shape: f32[1,32], index: 1, kind: input, shape index: {}]
  %s2 = inlined_call_operand.<no memory space> [shape: f32[1,1], index: 2, kind: input, shape index: {}]
  %s3 = inlined_call_operand.vmem [shape: f32[8,1], index: 3, kind: output, shape index: {}]
  %s4 = sld [smem:[#allocation0]]
  $region26: #{tpu_custom_call.1} parent=0
    _
  %s6 = ssub.s32 1, %s4
  %s7 = scalar_select 0, %s6, %s4
  %8 = sst [smem:[#allocation2]] %s2
  $region1: #{tpu_custom_call.1} parent=0
    #allocation3 [shape = 'u8[4096]{0}', space=vmem, size = 0x1000, scoped, tag = 'input window, operand 0, single buffered']
    #allocation4 [shape = 's32[1]{0}', space=sflag, size = 0x4, scoped, tag = 'scoped memory for tpu_custom_call.1']
    %9 = vsyncpa [#allocation4], 0
    // Predicated region
    $region2: #{tpu_custom_call.1} parent=1 // pred_check
      _
    $region3: #{tpu_custom_call.1} parent=1 // pred_check_branch
      %11 = sbr.rel (0) target = $region5
    $region4: #{tpu_custom_call.1} parent=1 // pred_region
      %s13 = ssub.s32 128, 128
      %14 = vsyncadd [#allocation4], %s13
      %s16 = sshll.u32 [#allocation3], 4
      %s17 = int_to_ptr.vmem [resolvable:$true] %s16
      %19 = dma.hbm_to_vmem [thread:$0]  %s0, 128, %s17, [#allocation4]
    $region5: #{tpu_custom_call.1} parent=1 // pred_fallthru
      _
    // Predicated region
    $region6: #{tpu_custom_call.1} parent=1 // pred_check
      _
    $region7: #{tpu_custom_call.1} parent=1 // pred_check_branch
      %21 = sbr.rel (0) target = $region9
    $region8: #{tpu_custom_call.1} parent=1 // pred_region
      _
    $region9: #{tpu_custom_call.1} parent=1 // pred_fallthru
      _
    // Predicated region
    $region10: #{tpu_custom_call.1} parent=1 // pred_check
      _
    $region11: #{tpu_custom_call.1} parent=1 // pred_check_branch
      %23 = sbr.rel (0) target = $region13
    $region12: #{tpu_custom_call.1} parent=1 // pred_region
      _
    $region13: #{tpu_custom_call.1} parent=1 // pred_fallthru
      _
    // Predicated region
    $region14: #{tpu_custom_call.1} parent=1 // pred_check
      _
    $region15: #{tpu_custom_call.1} parent=1 // pred_check_branch
      %25 = sbr.rel (0) target = $region17
    $region16: #{tpu_custom_call.1} parent=1 // pred_region
      %26 = dma.done [#allocation4], 128
    $region17: #{tpu_custom_call.1} parent=1 // pred_fallthru
      _
    %v27 = vld [vmem:[#allocation3] sm:$0xff]
    %v28 = vld [vmem:[%s1] sm:$0x1]
    %v30 = vlaneseq
    %v31 = vshrl.u32 %v30, 7
    %v32 = vsub.s32 0, %v31
    %v33 = vrot.slane %v28, %v32
    %v35 = vmul.f32 %v27, %v33
    %vm36 = vcmask 261120
    %v37 = vsel %vm36, %v35, 0.0
    %38 = vadd.xlane.f32.xlu0 %v37
    %v39 = vpop.xlane.xlu0 %38
    %s40 = sld [smem:[#allocation2]]
    %v41 = vstv %s40
    %v42 = vadd.f32 %v39, %v41
    %v43 = vsub.f32 0.0, %v42
    %v44 = vmul.f32 %v43, 1.442695
    %v45 = vpow.pop %v44
    %v46 = vadd.f32 %v45, 1.0
    %v47 = vrcp.pop %v46
    %v48 = vmul.f32 1.0, %v47
    %vm49 = vcmask 7168
    %50 = vst.msk [vmem:[%s3] sm:$0xff] %vm49, %v48
    // Predicated region
    $region18: #{tpu_custom_call.1} parent=1 // pred_check
      _
    $region19: #{tpu_custom_call.1} parent=1 // pred_check_branch
      %52 = sbr.rel (0) target = $region21
    $region20: #{tpu_custom_call.1} parent=1 // pred_region
      _
    $region21: #{tpu_custom_call.1} parent=1 // pred_fallthru
      _
    // Predicated region
    $region22: #{tpu_custom_call.1} parent=1 // pred_check
      _
    $region23: #{tpu_custom_call.1} parent=1 // pred_check_branch
      %54 = sbr.rel (0) target = $region25
    $region24: #{tpu_custom_call.1} parent=1 // pred_region
      _
    $region25: #{tpu_custom_call.1} parent=1 // pred_fallthru
      _
    %55 = vsyncpa [#allocation4], 1

</llo_original>
